<compile_context>
chip_gen: v6e
topology: v6e:2x2x1
jax: 0.10.0
libtpu: 0.0.40
codegen_flags: <defaults>
</compile_context>

<pallas_src>
import math

import jax
import jax.numpy as jnp
from jax.experimental import pallas as pl
from jax.experimental.pallas import tpu as pltpu


def _round_up(n, m):
    return (n + m - 1) // m * m


# ---------------------------------------------------------------------------
# Pass 1: y = G @ (x @ W^T + b), tiled over (batch, row-tile, k-tile),
# plus per-(batch, row-tile) partial BN statistics of y.
# ---------------------------------------------------------------------------
def _hgnn_pass1_kernel(x_ref, wt_ref, b_ref, g_ref, y_ref, st_ref, acc_ref):
    k = pl.program_id(2)

    @pl.when(k == 0)
    def _():
        acc_ref[...] = jnp.zeros_like(acc_ref)

    # Fused Linear for this k-tile of nodes: (tk, Cp) @ (Cp, Cp) on the MXU.
    h_k = jnp.dot(x_ref[...], wt_ref[...],
                  preferred_element_type=jnp.float32) + b_ref[...]
    # Hypergraph propagation partial product: (tm, tk) @ (tk, Cp).
    acc_ref[...] += jnp.dot(g_ref[...], h_k,
                            preferred_element_type=jnp.float32)

    @pl.when(k == pl.num_programs(2) - 1)
    def _():
        y = acc_ref[...]
        y_ref[...] = y.astype(y_ref.dtype)
        # Per-channel partial sums for BatchNorm statistics (one store).
        st_ref[...] = jnp.concatenate(
            [jnp.sum(y, axis=0, keepdims=True),
             jnp.sum(y * y, axis=0, keepdims=True)], axis=0)


# ---------------------------------------------------------------------------
# Pass 2: out = relu(y * scale + shift) + residual   (BN folded to FMA)
# ---------------------------------------------------------------------------
def _hgnn_pass2_kernel(y_ref, r_ref, sc_ref, sh_ref, o_ref):
    y_hat = y_ref[...] * sc_ref[...] + sh_ref[...]
    o_ref[...] = (jnp.maximum(y_hat, 0.0) + r_ref[...]).astype(o_ref.dtype)


def hgnn_forward(x, W, b, G, gamma, beta, eps=1e-5, tile_m=128, tile_k=128):
    """x: (B, N, C_in), W: (C_out, C_in), b: (C_out,), G: (B, N, N)."""
    B, N, Cin = x.shape
    Cout, Cin_w = W.shape
    assert Cin_w == Cin
    assert Cin == Cout, "residual add requires in_ch == n_out"

    LANE = 128
    Cp = _round_up(Cout, LANE)                 # lane-dense channel dim

    if N < 128:
        # Small node count: one node tile, only pad to the sublane multiple.
        Np = _round_up(N, 8)
        tm = tk = Np
    else:
        assert tile_m % 128 == 0 and tile_k % 128 == 0
        Np = _round_up(N, math.lcm(tile_m, tile_k))
        tm, tk = tile_m, tile_k

    nrt = Np // tm      # number of row tiles
    nkt = Np // tk      # number of contraction tiles

    f32 = jnp.float32
    xp = jnp.pad(x.astype(f32), ((0, 0), (0, Np - N), (0, Cp - Cin)))
    Gp = jnp.pad(G.astype(f32), ((0, 0), (0, Np - N), (0, Np - N)))
    Wt = jnp.pad(W.T.astype(f32), ((0, Cp - Cin), (0, Cp - Cout)))
    bp = jnp.pad(b.astype(f32), (0, Cp - Cout)).reshape(1, Cp)
    gp = jnp.pad(gamma.astype(f32), (0, Cp - Cout))
    btp = jnp.pad(beta.astype(f32), (0, Cp - Cout))

    flops = int(2 * B * Np * Cp * (Np + Cp))
    bytes_accessed = int(4 * (B * Np * Np + 3 * B * Np * Cp + Cp * Cp))

    # ---- Pass 1 ----------------------------------------------------------
    y, stats = pl.pallas_call(
        _hgnn_pass1_kernel,
        out_shape=(
            jax.ShapeDtypeStruct((B, Np, Cp), f32),         # staged y
            jax.ShapeDtypeStruct((B, nrt, 2, Cp), f32),     # partial BN stats
        ),
        grid=(B, nrt, nkt),
        in_specs=[
            pl.BlockSpec((None, tk, Cp), lambda bi, i, k: (bi, k, 0)),   # x k-tile
            pl.BlockSpec((Cp, Cp), lambda bi, i, k: (0, 0)),             # W^T
            pl.BlockSpec((1, Cp), lambda bi, i, k: (0, 0)),              # bias
            pl.BlockSpec((None, tm, tk), lambda bi, i, k: (bi, i, k)),   # G tile
        ],
        out_specs=(
            pl.BlockSpec((None, tm, Cp), lambda bi, i, k: (bi, i, 0)),
            pl.BlockSpec((None, None, 2, Cp), lambda bi, i, k: (bi, i, 0, 0)),
        ),
        scratch_shapes=[pltpu.VMEM((tm, Cp), jnp.float32)],
        compiler_params=pltpu.CompilerParams(
            dimension_semantics=("parallel", "parallel", "arbitrary")),
        cost_estimate=pl.CostEstimate(flops=flops, transcendentals=0,
                                      bytes_accessed=bytes_accessed),
    )(xp, Wt, bp, Gp)

    # ---- Tiny host-side reduction of partial stats -> folded BN params ----
    cnt = float(B * N)                       # real (unpadded) sample count
    mean = jnp.sum(stats[:, :, 0, :], axis=(0, 1)) / cnt
    var = jnp.maximum(jnp.sum(stats[:, :, 1, :], axis=(0, 1)) / cnt
                      - mean * mean, 0.0)
    inv_std = jax.lax.rsqrt(var + eps)
    scale = (gp * inv_std).reshape(1, Cp)
    shift = (btp - mean * gp * inv_std).reshape(1, Cp)

    # ---- Pass 2 ----------------------------------------------------------
    out_p = pl.pallas_call(
        _hgnn_pass2_kernel,
        out_shape=jax.ShapeDtypeStruct((B, Np, Cp), x.dtype),
        grid=(B, nrt),
        in_specs=[
            pl.BlockSpec((None, tm, Cp), lambda bi, i: (bi, i, 0)),   # y
            pl.BlockSpec((None, tm, Cp), lambda bi, i: (bi, i, 0)),   # residual
            pl.BlockSpec((1, Cp), lambda bi, i: (0, 0)),              # scale
            pl.BlockSpec((1, Cp), lambda bi, i: (0, 0)),              # shift
        ],
        out_specs=pl.BlockSpec((None, tm, Cp), lambda bi, i: (bi, i, 0)),
        compiler_params=pltpu.CompilerParams(
            dimension_semantics=("parallel", "parallel")),
    )(y, xp, scale, shift)

    return out_p[:, :N, :Cout]


def hgnn_reference(x, W, b, G, gamma, beta, eps=1e-5):
    h = jnp.einsum("bnc,oc->bno", x, W) + b[None, None, :]
    y = jnp.einsum("bnm,bmo->bno", G, h)
    mean = jnp.mean(y, axis=(0, 1), keepdims=True)
    var = jnp.mean(jnp.square(y - mean), axis=(0, 1), keepdims=True)
    y_hat = (y - mean) / jnp.sqrt(var + eps) * gamma[None, None, :] + beta[None, None, :]
    return jnp.maximum(y_hat, 0.0) + x


if __name__ == "__main__":
    B, N, C = 2, 16, 32   # batch, nodes, in_ch == n_out

    key = jax.random.PRNGKey(0)
    kx, kg, kw, kb = jax.random.split(key, 4)

    x = jax.random.normal(kx, (B, N, C), dtype=jnp.float32)
    G = jax.random.normal(kg, (B, N, N), dtype=jnp.float32)

    # nn.Linear(in_ch, n_out): W (n_out, in_ch), b (n_out,)
    W = jax.random.normal(kw, (C, C), dtype=jnp.float32) * (1.0 / jnp.sqrt(C))
    bvec = jax.random.normal(kb, (C,), dtype=jnp.float32) * 0.01
    # BatchNorm1d(n_out) default affine init
    gamma = jnp.ones((C,), dtype=jnp.float32)
    beta = jnp.zeros((C,), dtype=jnp.float32)

    out = jax.block_until_ready(hgnn_forward(x, W, bvec, G, gamma, beta))

    ref = hgnn_reference(x, W, bvec, G, gamma, beta)
    assert jnp.allclose(out, ref, rtol=1e-4, atol=1e-4), "mismatch vs reference"

    # TODO(synk): BatchNorm1d running_mean/running_var buffer updates (training
    # bookkeeping, not part of the forward output) are not tracked.
    print("KERNEL_OK")
</pallas_src>

<mosaic_0001>
module attributes {stable_mosaic.version = 11 : i64} {
  func.func @_hgnn_pass1_kernel(%arg0: i32, %arg1: i32, %arg2: i32, %arg3: memref<1x16x128xf32, #tpu.memory_space<vmem>>, %arg4: memref<128x128xf32, #tpu.memory_space<vmem>>, %arg5: memref<1x128xf32, #tpu.memory_space<vmem>>, %arg6: memref<1x16x16xf32, #tpu.memory_space<vmem>>, %arg7: memref<1x16x128xf32, #tpu.memory_space<vmem>>, %arg8: memref<1x1x2x128xf32, #tpu.memory_space<vmem>>, %arg9: memref<16x128xf32, #tpu.memory_space<vmem>>) attributes {dimension_semantics = [#tpu.dimension_semantics<parallel>, #tpu.dimension_semantics<parallel>, #tpu.dimension_semantics<arbitrary>], iteration_bounds = array<i64: 2, 1, 1>, scalar_prefetch = 0 : i64, scratch_operands = 1 : i64, tpu.core_type = #tpu.core_type<tc>, window_params = [{transform_indices = @transform_0, window_bounds = array<i64: 1, 16, 128>}, {pipeline_mode = #tpu.pipeline_mode<synchronous>, transform_indices = @transform_1, window_bounds = array<i64: 128, 128>}, {pipeline_mode = #tpu.pipeline_mode<synchronous>, transform_indices = @transform_2, window_bounds = array<i64: 1, 128>}, {transform_indices = @transform_3, window_bounds = array<i64: 1, 16, 16>}, {transform_indices = @transform_4, window_bounds = array<i64: 1, 16, 128>}, {transform_indices = @transform_5, window_bounds = array<i64: 1, 1, 2, 128>}]} {
    %c0_i32 = arith.constant 0 : i32
    %0 = arith.cmpi eq, %arg2, %c0_i32 : i32
    %1 = arith.extui %0 : i1 to i32
    %c0_i32_0 = arith.constant 0 : i32
    %2 = arith.cmpi ne, %1, %c0_i32_0 : i32
    scf.if %2 {
      %cst_17 = arith.constant 0.000000e+00 : f32
      %19 = vector.broadcast %cst_17 : f32 to vector<16x128xf32>
      %c0_18 = arith.constant 0 : index
      %c0_19 = arith.constant 0 : index
      %20 = vector.load %arg9[%c0_18, %c0_19] : memref<16x128xf32, #tpu.memory_space<vmem>>, vector<16x128xf32>
      tpu.vector_store %arg9[%c0_18, %c0_19], %19 {strides = array<i32>} : memref<16x128xf32, #tpu.memory_space<vmem>>, vector<16x128xf32>,
    } else {
    }
    %c0 = arith.constant 0 : index
    %c0_1 = arith.constant 0 : index
    %c0_2 = arith.constant 0 : index
    %3 = vector.load %arg3[%c0, %c0_1, %c0_2] : memref<1x16x128xf32, #tpu.memory_space<vmem>>, vector<1x16x128xf32>
    %4 = vector.shape_cast %3 : vector<1x16x128xf32> to vector<16x128xf32>
    %c0_3 = arith.constant 0 : index
    %c0_4 = arith.constant 0 : index
    %5 = vector.load %arg4[%c0_3, %c0_4] : memref<128x128xf32, #tpu.memory_space<vmem>>, vector<128x128xf32>
    %cst = arith.constant dense<0.000000e+00> : vector<16x128xf32>
    %6 = tpu.matmul %4, %5, %cst {dimension_numbers = #tpu.dot_dimension_numbers<[1], [0], [0], [1], [0, 0, 1, 1], [], []>} : vector<16x128xf32>, vector<128x128xf32>, vector<16x128xf32> -> vector<16x128xf32>
    %c0_5 = arith.constant 0 : index
    %c0_6 = arith.constant 0 : index
    %7 = vector.load %arg5[%c0_5, %c0_6] : memref<1x128xf32, #tpu.memory_space<vmem>>, vector<1x128xf32>
    %8 = vector.broadcast %7 : vector<1x128xf32> to vector<16x128xf32>
    %9 = arith.addf %6, %8 : vector<16x128xf32>
    %c0_7 = arith.constant 0 : index
    %c0_8 = arith.constant 0 : index
    %10 = vector.load %arg9[%c0_7, %c0_8] : memref<16x128xf32, #tpu.memory_space<vmem>>, vector<16x128xf32>
    %c0_9 = arith.constant 0 : index
    %c0_10 = arith.constant 0 : index
    %c0_11 = arith.constant 0 : index
    %11 = vector.load %arg6[%c0_9, %c0_10, %c0_11] : memref<1x16x16xf32, #tpu.memory_space<vmem>>, vector<1x16x16xf32>
    %12 = vector.shape_cast %11 : vector<1x16x16xf32> to vector<16x16xf32>
    %cst_12 = arith.constant dense<0.000000e+00> : vector<16x128xf32>
    %13 = tpu.matmul %12, %9, %cst_12 {dimension_numbers = #tpu.dot_dimension_numbers<[1], [0], [0], [1], [0, 0, 1, 1], [], []>} : vector<16x16xf32>, vector<16x128xf32>, vector<16x128xf32> -> vector<16x128xf32>
    %14 = arith.addf %10, %13 : vector<16x128xf32>
    %c0_13 = arith.constant 0 : index
    %c0_14 = arith.constant 0 : index
    %15 = vector.load %arg9[%c0_13, %c0_14] : memref<16x128xf32, #tpu.memory_space<vmem>>, vector<16x128xf32>
    tpu.vector_store %arg9[%c0_13, %c0_14], %14 {strides = array<i32>} : memref<16x128xf32, #tpu.memory_space<vmem>>, vector<16x128xf32>,
    %c0_i32_15 = arith.constant 0 : i32
    %16 = arith.cmpi eq, %arg2, %c0_i32_15 : i32
    %17 = arith.extui %16 : i1 to i32
    %c0_i32_16 = arith.constant 0 : i32
    %18 = arith.cmpi ne, %17, %c0_i32_16 : i32
    scf.if %18 {
      %c0_17 = arith.constant 0 : index
      %c0_18 = arith.constant 0 : index
      %19 = vector.load %arg9[%c0_17, %c0_18] : memref<16x128xf32, #tpu.memory_space<vmem>>, vector<16x128xf32>
      %c0_19 = arith.constant 0 : index
      %c0_20 = arith.constant 0 : index
      %c0_21 = arith.constant 0 : index
      %20 = vector.load %arg7[%c0_19, %c0_20, %c0_21] : memref<1x16x128xf32, #tpu.memory_space<vmem>>, vector<1x16x128xf32>
      %21 = vector.shape_cast %20 : vector<1x16x128xf32> to vector<16x128xf32>
      %22 = vector.shape_cast %19 : vector<16x128xf32> to vector<1x16x128xf32>
      tpu.vector_store %arg7[%c0_19, %c0_20, %c0_21], %22 {strides = array<i32>} : memref<1x16x128xf32, #tpu.memory_space<vmem>>, vector<1x16x128xf32>,
      %cst_22 = arith.constant dense<0.000000e+00> : vector<128xf32>
      %23 = vector.multi_reduction <add>, %19, %cst_22 [0] : vector<16x128xf32> to vector<128xf32>
      %24 = vector.shape_cast %23 : vector<128xf32> to vector<1x128xf32>
      %25 = arith.mulf %19, %19 : vector<16x128xf32>
      %cst_23 = arith.constant dense<0.000000e+00> : vector<128xf32>
      %26 = vector.multi_reduction <add>, %25, %cst_23 [0] : vector<16x128xf32> to vector<128xf32>
      %27 = vector.shape_cast %26 : vector<128xf32> to vector<1x128xf32>
      %28 = tpu.concatenate %24, %27 in 0 : vector<1x128xf32>, vector<1x128xf32> -> vector<2x128xf32>
      %c0_24 = arith.constant 0 : index
      %c0_25 = arith.constant 0 : index
      %c0_26 = arith.constant 0 : index
      %c0_27 = arith.constant 0 : index
      %29 = vector.load %arg8[%c0_24, %c0_25, %c0_26, %c0_27] : memref<1x1x2x128xf32, #tpu.memory_space<vmem>>, vector<1x1x2x128xf32>
      %30 = vector.shape_cast %29 : vector<1x1x2x128xf32> to vector<2x128xf32>
      %31 = vector.shape_cast %28 : vector<2x128xf32> to vector<1x1x2x128xf32>
      tpu.vector_store %arg8[%c0_24, %c0_25, %c0_26, %c0_27], %31 {strides = array<i32>} : memref<1x1x2x128xf32, #tpu.memory_space<vmem>>, vector<1x1x2x128xf32>,
    } else {
    }
    return
  }
  func.func @transform_0(%arg0: i32, %arg1: i32, %arg2: i32) -> (i32, i32, i32) {
    %c0_i32 = arith.constant 0 : i32
    %c0_i32_0 = arith.constant 0 : i32
    return %arg0, %arg2, %c0_i32 : i32, i32, i32
  }
  func.func @transform_1(%arg0: i32, %arg1: i32, %arg2: i32) -> (i32, i32) {
    %c0_i32 = arith.constant 0 : i32
    %c0_i32_0 = arith.constant 0 : i32
    %c0_i32_1 = arith.constant 0 : i32
    return %c0_i32, %c0_i32_0 : i32, i32
  }
  func.func @transform_2(%arg0: i32, %arg1: i32, %arg2: i32) -> (i32, i32) {
    %c0_i32 = arith.constant 0 : i32
    %c0_i32_0 = arith.constant 0 : i32
    %c0_i32_1 = arith.constant 0 : i32
    return %c0_i32, %c0_i32_0 : i32, i32
  }
  func.func @transform_3(%arg0: i32, %arg1: i32, %arg2: i32) -> (i32, i32, i32) {
    %c0_i32 = arith.constant 0 : i32
    return %arg0, %arg1, %arg2 : i32, i32, i32
  }
  func.func @transform_4(%arg0: i32, %arg1: i32, %arg2: i32) -> (i32, i32, i32) {
    %c0_i32 = arith.constant 0 : i32
    %c0_i32_0 = arith.constant 0 : i32
    return %arg0, %arg1, %c0_i32 : i32, i32, i32
  }
  func.func @transform_5(%arg0: i32, %arg1: i32, %arg2: i32) -> (i32, i32, i32, i32) {
    %c0_i32 = arith.constant 0 : i32
    %c0_i32_0 = arith.constant 0 : i32
    %c0_i32_1 = arith.constant 0 : i32
    return %arg0, %arg1, %c0_i32, %c0_i32_0 : i32, i32, i32, i32
  }
}

</mosaic_0001>

<llo_original>
// kernel: tpu_custom_call.1
$region0: #{tpu_custom_call.1}
  #allocation0 [shape = 'u32[]', space=smem, size = 0x4, offset = 0x4, fixed_abs, tag = 'smem constant byte address 0x4 - core index']
  #allocation1 [shape = 'u32[144,128]{1,0:T(1,128)}', space=vmem, size = 0x12000, scoped, tag = 'internal scratch']
  #allocation2 [shape = 'f32[16,128]{1,0:T(8,128)}', space=vmem, size = 0x2000, scoped, tag = 'scratch operand']
  %s0 = inlined_call_operand.hbm [shape: f32[2,16,128], index: 0, kind: input, shape index: {}]
  %s1 = inlined_call_operand.hbm [shape: f32[128,128], index: 1, kind: input, shape index: {}]
  %s2 = inlined_call_operand.vmem [shape: f32[1,128], index: 2, kind: input, shape index: {}]
  %s3 = inlined_call_operand.hbm [shape: f32[2,16,16], index: 3, kind: input, shape index: {}]
  %s4 = inlined_call_operand.hbm [shape: f32[2,16,128], index: 4, kind: output, shape index: {0}]
  %s5 = inlined_call_operand.hbm [shape: f32[2,1,2,128], index: 5, kind: output, shape index: {1}]
  %6 = xla_tuple %s4, %s5
  %s7 = sld [smem:[#allocation0]]
  $region77: #{tpu_custom_call.1} parent=0
    _
  %s9 = ssub.s32 1, %s7
  %s10 = scalar_select 0, %s9, %s7
  $region1: #{tpu_custom_call.1} parent=0
    #allocation3 [shape = 'u8[16384]{0}', space=vmem, size = 0x4000, scoped, tag = 'input window, operand 0']
    #allocation4 [shape = 's32[2]{0}', space=sflag, size = 0x8, scoped, tag = 'scoped memory for tpu_custom_call.1']
    #allocation5 [shape = 's32[2]{0}', space=sflag, size = 0x8, scoped, tag = 'scoped memory for tpu_custom_call.1']
    #allocation6 [shape = 'u8[65536]{0}', space=vmem, size = 0x10000, scoped, tag = 'input window, operand 1, single buffered']
    #allocation7 [shape = 's32[1]{0}', space=sflag, size = 0x4, scoped, tag = 'scoped memory for tpu_custom_call.1']
    #allocation8 [shape = 'u8[16384]{0}', space=vmem, size = 0x4000, scoped, tag = 'input window, operand 3']
    #allocation9 [shape = 'u8[16384]{0}', space=vmem, size = 0x4000, scoped, tag = 'output window, operand 0']
    #allocation10 [shape = 'u8[2048]{0}', space=vmem, size = 0x800, scoped, tag = 'output window, operand 1']
    #allocation11 [shape = 's32[2]{0}', space=sflag, size = 0x8, scoped, tag = 'scoped memory for tpu_custom_call.1']
    %11 = vsyncpa [#allocation4], 0
    %s12 = scalar_lea.sflag [#allocation4], 1
    %13 = vsyncpa %s12, 0
    %14 = vsyncpa [#allocation7], 0
    %15 = vsyncpa [#allocation5], 0
    %s16 = scalar_lea.sflag [#allocation5], 1
    %17 = vsyncpa %s16, 0
    %18 = vsyncpa [#allocation11], 0
    %s19 = scalar_lea.sflag [#allocation11], 1
    %20 = vsyncpa %s19, 0
    loop: start=0, step=1, limit=4
    $region2: #{tpu_custom_call.1} parent=1 // loop_pre_header
      _
    $region3: #{tpu_custom_call.1} parent=1 // loop_header
      %s22 = sphi 0, %s26
      %p23 = scmp.ge.s32.totalorder %s22, 4
      %s29 = sphi 0, %s48
      %s30 = sphi 0, %s44
      %s31 = sphi 0, %s40
      %s32 = sphi 0, %s29
      %s33 = sphi 0, %s30
      %s34 = sphi 0, %s31
      %s35 = sphi 0, %s32
      %s36 = sphi 0, %s33
      %s37 = sphi 0, %s34
      %s53 = sphi 0, %s55
      %s56 = sphi 0, %s53
      %s57 = sphi 0, %s56
      %s73 = sphi 0, %s57
      %s77 = sphi 0, %s77
      %s79 = sphi 0, %s77
      %s80 = sphi 0, %s79
      %s94 = sphi 0, %s80
      %s98 = sphi 0, %s98
      %s100 = sphi 0, %s98
      %s101 = sphi 0, %s100
      %s115 = sphi 0, %s101
      %s125 = sphi 0, %s127
      %s128 = sphi 0, %s125
      %s129 = sphi 0, %s128
      %s145 = sphi 0, %s129
      %s153 = sphi 0, %s155
      %s156 = sphi 0, %s153
      %s157 = sphi 0, %s156
      %s173 = sphi 0, %s157
      %s181 = sphi 0, %s183
      %s184 = sphi 0, %s181
      %s185 = sphi 0, %s184
      %s201 = sphi 0, %s185
    $region4: #{tpu_custom_call.1} parent=1 // loop_header_branch
      %25 = sbr.rel (%p23) target = $region8
    $region5: #{tpu_custom_call.1} parent=1 // loop_body
      %s27 = ssub.s32 %s22, 1
      %s28 = ssub.s32 %s22, 2
      %s38 = sadd.s32 1, %s31
      %p39 = scmp.ge.s32.totalorder %s38, 1
      %s40 = scalar_select %p39, 0, %s38
      %s41 = sadd.s32 1, %s30
      %s42 = scalar_select %p39, %s41, %s30
      %p43 = scmp.ge.s32.totalorder %s42, 1
      %s44 = scalar_select %p43, 0, %s42
      %s45 = sadd.s32 1, %s29
      %s46 = scalar_select %p43, %s45, %s29
      %p47 = scmp.ge.s32.totalorder %s46, 2
      %s48 = scalar_select %p47, 0, %s46
      %s49 = ssub.s32 %s29, %s48
      %s50 = ssub.s32 %s31, %s40
      %s51 = sor.u32 %s49, %s50
      %p52 = scmp.eq.s32.totalorder %s51, 0
      %s54 = sadd.s32 %s53, 1
      %s55 = scalar_select %p52, %s53, %s54
      %p58 = pneg %p52
      %p59 = scmp.eq.s32.totalorder %s22, 1
      %p60 = por %p58, %p59
      %p61 = scmp.ne.s32.totalorder %s53, %s56
      %p62 = scmp.eq.s32.totalorder %s22, 0
      %p63 = por %p61, %p62
      %p64 = scmp.ne.s32.totalorder %s53, %s56
      %p65 = scmp.eq.s32.totalorder %s27, 1
      %p66 = por %p64, %p65
      %p67 = scmp.ne.s32.totalorder %s56, %s57
      %p68 = scmp.eq.s32.totalorder %s27, 0
      %p69 = por %p67, %p68
      %p70 = scmp.ne.s32.totalorder %s56, %s57
      %p71 = scmp.eq.s32.totalorder %s28, 1
      %p72 = por %p70, %p71
      %p74 = scmp.ne.s32.totalorder %s57, %s73
      %p75 = scmp.eq.s32.totalorder %s28, 0
      %p76 = por %p74, %p75
      %s78 = sadd.s32 %s77, 1
      %p81 = scmp.eq.s32.totalorder %s22, 1
      %p82 = scmp.ne.s32.totalorder %s77, %s79
      %p83 = scmp.eq.s32.totalorder %s22, 0
      %p84 = por %p82, %p83
      %p85 = scmp.ne.s32.totalorder %s77, %s79
      %p86 = scmp.eq.s32.totalorder %s27, 1
      %p87 = por %p85, %p86
      %p88 = scmp.ne.s32.totalorder %s79, %s80
      %p89 = scmp.eq.s32.totalorder %s27, 0
      %p90 = por %p88, %p89
      %p91 = scmp.ne.s32.totalorder %s79, %s80
      %p92 = scmp.eq.s32.totalorder %s28, 1
      %p93 = por %p91, %p92
      %p95 = scmp.ne.s32.totalorder %s80, %s94
      %p96 = scmp.eq.s32.totalorder %s28, 0
      %p97 = por %p95, %p96
      %s99 = sadd.s32 %s98, 1
      %p102 = scmp.eq.s32.totalorder %s22, 1
      %p103 = scmp.ne.s32.totalorder %s98, %s100
      %p104 = scmp.eq.s32.totalorder %s22, 0
      %p105 = por %p103, %p104
      %p106 = scmp.ne.s32.totalorder %s98, %s100
      %p107 = scmp.eq.s32.totalorder %s27, 1
      %p108 = por %p106, %p107
      %p109 = scmp.ne.s32.totalorder %s100, %s101
      %p110 = scmp.eq.s32.totalorder %s27, 0
      %p111 = por %p109, %p110
      %p112 = scmp.ne.s32.totalorder %s100, %s101
      %p113 = scmp.eq.s32.totalorder %s28, 1
      %p114 = por %p112, %p113
      %p116 = scmp.ne.s32.totalorder %s101, %s115
      %p117 = scmp.eq.s32.totalorder %s28, 0
      %p118 = por %p116, %p117
      %s119 = ssub.s32 %s29, %s48
      %s120 = ssub.s32 %s30, %s44
      %s121 = sor.u32 %s119, %s120
      %s122 = ssub.s32 %s31, %s40
      %s123 = sor.u32 %s121, %s122
      %p124 = scmp.eq.s32.totalorder %s123, 0
      %s126 = sadd.s32 %s125, 1
      %s127 = scalar_select %p124, %s125, %s126
      %p130 = pneg %p124
      %p131 = scmp.eq.s32.totalorder %s22, 1
      %p132 = por %p130, %p131
      %p133 = scmp.ne.s32.totalorder %s125, %s128
      %p134 = scmp.eq.s32.totalorder %s22, 0
      %p135 = por %p133, %p134
      %p136 = scmp.ne.s32.totalorder %s125, %s128
      %p137 = scmp.eq.s32.totalorder %s27, 1
      %p138 = por %p136, %p137
      %p139 = scmp.ne.s32.totalorder %s128, %s129
      %p140 = scmp.eq.s32.totalorder %s27, 0
      %p141 = por %p139, %p140
      %p142 = scmp.ne.s32.totalorder %s128, %s129
      %p143 = scmp.eq.s32.totalorder %s28, 1
      %p144 = por %p142, %p143
      %p146 = scmp.ne.s32.totalorder %s129, %s145
      %p147 = scmp.eq.s32.totalorder %s28, 0
      %p148 = por %p146, %p147
      %s149 = ssub.s32 %s29, %s48
      %s150 = ssub.s32 %s30, %s44
      %s151 = sor.u32 %s149, %s150
      %p152 = scmp.eq.s32.totalorder %s151, 0
      %s154 = sadd.s32 %s153, 1
      %s155 = scalar_select %p152, %s153, %s154
      %p158 = pneg %p152
      %p159 = scmp.eq.s32.totalorder %s22, 1
      %p160 = por %p158, %p159
      %p161 = scmp.ne.s32.totalorder %s153, %s156
      %p162 = scmp.eq.s32.totalorder %s22, 0
      %p163 = por %p161, %p162
      %p164 = scmp.ne.s32.totalorder %s153, %s156
      %p165 = scmp.eq.s32.totalorder %s27, 1
      %p166 = por %p164, %p165
      %p167 = scmp.ne.s32.totalorder %s156, %s157
      %p168 = scmp.eq.s32.totalorder %s27, 0
      %p169 = por %p167, %p168
      %p170 = scmp.ne.s32.totalorder %s156, %s157
      %p171 = scmp.eq.s32.totalorder %s28, 1
      %p172 = por %p170, %p171
      %p174 = scmp.ne.s32.totalorder %s157, %s173
      %p175 = scmp.eq.s32.totalorder %s28, 0
      %p176 = por %p174, %p175
      %s177 = ssub.s32 %s29, %s48
      %s178 = ssub.s32 %s30, %s44
      %s179 = sor.u32 %s177, %s178
      %p180 = scmp.eq.s32.totalorder %s179, 0
      %s182 = sadd.s32 %s181, 1
      %s183 = scalar_select %p180, %s181, %s182
      %p186 = pneg %p180
      %p187 = scmp.eq.s32.totalorder %s22, 1
      %p188 = por %p186, %p187
      %p189 = scmp.ne.s32.totalorder %s181, %s184
      %p190 = scmp.eq.s32.totalorder %s22, 0
      %p191 = por %p189, %p190
      %p192 = scmp.ne.s32.totalorder %s181, %s184
      %p193 = scmp.eq.s32.totalorder %s27, 1
      %p194 = por %p192, %p193
      %p195 = scmp.ne.s32.totalorder %s184, %s185
      %p196 = scmp.eq.s32.totalorder %s27, 0
      %p197 = por %p195, %p196
      %p198 = scmp.ne.s32.totalorder %s184, %s185
      %p199 = scmp.eq.s32.totalorder %s28, 1
      %p200 = por %p198, %p199
      %p202 = scmp.ne.s32.totalorder %s185, %s201
      %p203 = scmp.eq.s32.totalorder %s28, 0
      %p204 = por %p202, %p203
      %p205 = scmp.le.s32.totalorder 1, %s22
      %p206 = scmp.lt.s32.totalorder %s22, 3
      %p207 = pnand %p205, %p206
      %p208 = pneg %p207
      // Predicated region
      $region9: #{tpu_custom_call.1} parent=5 // pred_check
        _
      $region10: #{tpu_custom_call.1} parent=5 // pred_check_branch
        %210 = sbr.rel (%p207) target = $region12
      $region11: #{tpu_custom_call.1} parent=5 // pred_region
        %s211 = ssub.s32 %s22, 1
        // Predicated region
        $region13: #{tpu_custom_call.1} parent=11 // pred_check
          %p212 = pneg %p90
        $region14: #{tpu_custom_call.1} parent=11 // pred_check_branch
          %214 = sbr.rel (%p212) target = $region16
        $region15: #{tpu_custom_call.1} parent=11 // pred_region
          %s216 = ssub.s32 2048, 2048
          %217 = vsyncadd [#allocation7], %s216
          %s218 = sshll.u32 [#allocation6], 4
          %s219 = int_to_ptr.vmem [resolvable:$true] %s218
          %224 = dma.hbm_to_vmem [thread:$0]  %s1, 2048, %s219, [#allocation7], 128, 128, 8
        $region16: #{tpu_custom_call.1} parent=11 // pred_fallthru
          _
        // Predicated region
        $region17: #{tpu_custom_call.1} parent=11 // pred_check
          %p225 = pneg %p111
        $region18: #{tpu_custom_call.1} parent=11 // pred_check_branch
          %227 = sbr.rel (%p225) target = $region20
        $region19: #{tpu_custom_call.1} parent=11 // pred_region
          _
        $region20: #{tpu_custom_call.1} parent=11 // pred_fallthru
          _
      $region12: #{tpu_custom_call.1} parent=5 // pred_fallthru
        _
      %p228 = scmp.lt.s32.totalorder %s22, 2
      // Predicated region
      $region21: #{tpu_custom_call.1} parent=5 // pred_check
        %p229 = pneg %p228
      $region22: #{tpu_custom_call.1} parent=5 // pred_check_branch
        %231 = sbr.rel (%p229) target = $region24
      $region23: #{tpu_custom_call.1} parent=5 // pred_region
        // Predicated region
        $region25: #{tpu_custom_call.1} parent=23 // pred_check
          %p232 = pneg %p63
        $region26: #{tpu_custom_call.1} parent=23 // pred_check_branch
          %234 = sbr.rel (%p232) target = $region28
        $region27: #{tpu_custom_call.1} parent=23 // pred_region
          %s235 = sand.u32 %s22, 1
          %s236 = scalar_lea.sflag [#allocation4], %s235
          %s237 = sand.u32 %s53, 1
          %s238 = smul.addr %s237, 16
          %s239 = scalar_lea.vmem [#allocation3], %s238
          %s240 = smul.u32 2, %s31
          %s242 = ssub.s32 256, 256
          %243 = vsyncadd %s236, %s242
          %s244 = smul.addr %s29, 2
          %s245 = sadd.s32 %s240, %s244
          %s246 = smul.addr %s245, 128
          %s247 = scalar_lea.hbm %s0, %s246
          %s248 = sshll.u32 %s239, 4
          %s249 = int_to_ptr.vmem [resolvable:$true] %s248
          %254 = dma.hbm_to_vmem [thread:$0]  %s247, 256, %s249, %s236, 128, 128, 8
        $region28: #{tpu_custom_call.1} parent=23 // pred_fallthru
          _
        // Predicated region
        $region29: #{tpu_custom_call.1} parent=23 // pred_check
          %p255 = pneg %p135
        $region30: #{tpu_custom_call.1} parent=23 // pred_check_branch
          %257 = sbr.rel (%p255) target = $region32
        $region31: #{tpu_custom_call.1} parent=23 // pred_region
          %s258 = sand.u32 %s22, 1
          %s259 = scalar_lea.sflag [#allocation4], %s258
          %s260 = sand.u32 %s125, 1
          %s261 = smul.addr %s260, 16
          %s262 = scalar_lea.vmem [#allocation8], %s261
          %s263 = smul.u32 2, %s30
          %s265 = ssub.s32 256, 256
          %266 = vsyncadd %s259, %s265
          %s267 = sadd.s32 %s31, %s263
          %s268 = smul.addr %s29, 2
          %s269 = sadd.s32 %s267, %s268
          %s270 = smul.addr %s269, 128
          %s271 = scalar_lea.hbm %s3, %s270
          %s272 = sshll.u32 %s262, 4
          %s273 = int_to_ptr.vmem [resolvable:$true] %s272
          %278 = dma.hbm_to_vmem [thread:$0]  %s271, 256, %s273, %s259, 128, 128, 8
        $region32: #{tpu_custom_call.1} parent=23 // pred_fallthru
          _
      $region24: #{tpu_custom_call.1} parent=5 // pred_fallthru
        _
      %p279 = scmp.le.s32.totalorder 1, %s22
      %p280 = scmp.lt.s32.totalorder %s22, 3
      %p281 = pnand %p279, %p280
      %p282 = pneg %p281
      // Predicated region
      $region33: #{tpu_custom_call.1} parent=5 // pred_check
        _
      $region34: #{tpu_custom_call.1} parent=5 // pred_check_branch
        %284 = sbr.rel (%p281) target = $region36
      $region35: #{tpu_custom_call.1} parent=5 // pred_region
        %s285 = ssub.s32 %s22, 1
        %s286 = sand.u32 %s27, 1
        %s287 = scalar_lea.sflag [#allocation4], %s286
        %s288 = sand.u32 %s56, 1
        %s289 = smul.addr %s288, 16
        %s290 = scalar_lea.vmem [#allocation3], %s289
        // Predicated region
        $region37: #{tpu_custom_call.1} parent=35 // pred_check
          %p291 = pneg %p69
        $region38: #{tpu_custom_call.1} parent=35 // pred_check_branch
          %293 = sbr.rel (%p291) target = $region40
        $region39: #{tpu_custom_call.1} parent=35 // pred_region
          %294 = dma.done %s287, 256
        $region40: #{tpu_custom_call.1} parent=35 // pred_fallthru
          _
        // Predicated region
        $region41: #{tpu_custom_call.1} parent=35 // pred_check
          %p295 = pneg %p90
        $region42: #{tpu_custom_call.1} parent=35 // pred_check_branch
          %297 = sbr.rel (%p295) target = $region44
        $region43: #{tpu_custom_call.1} parent=35 // pred_region
          %298 = dma.done [#allocation7], 2048
        $region44: #{tpu_custom_call.1} parent=35 // pred_fallthru
          _
        %s299 = sand.u32 %s27, 1
        %s300 = scalar_lea.sflag [#allocation4], %s299
        %s301 = sand.u32 %s128, 1
        %s302 = smul.addr %s301, 16
        %s303 = scalar_lea.vmem [#allocation8], %s302
        // Predicated region
        $region45: #{tpu_custom_call.1} parent=35 // pred_check
          %p304 = pneg %p141
        $region46: #{tpu_custom_call.1} parent=35 // pred_check_branch
          %306 = sbr.rel (%p304) target = $region48
        $region47: #{tpu_custom_call.1} parent=35 // pred_region
          %307 = dma.done %s300, 256
        $region48: #{tpu_custom_call.1} parent=35 // pred_fallthru
          _
        %s308 = sand.u32 %s27, 1
        %s309 = scalar_lea.sflag [#allocation4], %s308
        %s310 = sand.u32 %s56, 1
        %s311 = smul.addr %s310, 16
        %s312 = scalar_lea.vmem [#allocation3], %s311
        %p313 = pneg %p69
        %p314 = pneg %p66
        %p315 = pneg %p90
        %p316 = pneg %p87
        %p317 = pneg %p111
        %p318 = pneg %p108
        %s319 = sand.u32 %s27, 1
        %s320 = scalar_lea.sflag [#allocation4], %s319
        %s321 = sand.u32 %s128, 1
        %s322 = smul.addr %s321, 16
        %s323 = scalar_lea.vmem [#allocation8], %s322
        %p324 = pneg %p141
        %p325 = pneg %p138
        %p326 = pneg %p169
        %p327 = pneg %p166
        %s328 = sand.u32 %s156, 1
        %s329 = scalar_lea.sflag [#allocation5], %s328
        %s330 = sand.u32 %s156, 1
        %s331 = smul.addr %s330, 16
        %s332 = scalar_lea.vmem [#allocation9], %s331
        %p333 = pneg %p197
        %p334 = pneg %p194
        %s335 = sand.u32 %s184, 1
        %s336 = scalar_lea.sflag [#allocation11], %s335
        %s337 = sand.u32 %s184, 1
        %s338 = smul.addr %s337, 2
        %s339 = scalar_lea.vmem [#allocation10], %s338
        %s340 = smul.u32 2, %s34
        %s341 = smul.u32 2, %s33
        %s342 = smul.u32 2, %s33
        %p343 = scmp.eq.s32.totalorder %s34, 0
        // Predicated region
        $region49: #{tpu_custom_call.1} parent=35 // pred_check
          %p344 = pneg %p343
        $region50: #{tpu_custom_call.1} parent=35 // pred_check_branch
          %346 = sbr.rel (%p344) target = $region52
        $region51: #{tpu_custom_call.1} parent=35 // pred_region
          %347 = vst [vmem:[#allocation2] sm:$0xff] 0.0
          %348 = vst [vmem:[#allocation2 + $0x8] sm:$0xff] 0.0
        $region52: #{tpu_custom_call.1} parent=35 // pred_fallthru
          _
        %v349 = vld [vmem:[%s290] sm:$0xff]
        %v350 = vld [vmem:[%s290 + $0x8] sm:$0xff]
        %v351 = vld [vmem:[#allocation6] sm:$0xff]
        %v352 = vld [vmem:[#allocation6 + $0x8] sm:$0xff]
        %v353 = vld [vmem:[#allocation6 + $0x10] sm:$0xff]
        %v354 = vld [vmem:[#allocation6 + $0x18] sm:$0xff]
        %v355 = vld [vmem:[#allocation6 + $0x20] sm:$0xff]
        %v356 = vld [vmem:[#allocation6 + $0x28] sm:$0xff]
        %v357 = vld [vmem:[#allocation6 + $0x30] sm:$0xff]
        %v358 = vld [vmem:[#allocation6 + $0x38] sm:$0xff]
        %v359 = vld [vmem:[#allocation6 + $0x40] sm:$0xff]
        %v360 = vld [vmem:[#allocation6 + $0x48] sm:$0xff]
        %v361 = vld [vmem:[#allocation6 + $0x50] sm:$0xff]
        %v362 = vld [vmem:[#allocation6 + $0x58] sm:$0xff]
        %v363 = vld [vmem:[#allocation6 + $0x60] sm:$0xff]
        %v364 = vld [vmem:[#allocation6 + $0x68] sm:$0xff]
        %v365 = vld [vmem:[#allocation6 + $0x70] sm:$0xff]
        %v366 = vld [vmem:[#allocation6 + $0x78] sm:$0xff]
        %v367 = vld [vmem:[%s2] sm:$0x1]
        %v369 = vlaneseq
        %v370 = vshrl.u32 %v369, 7
        %v371 = vsub.s32 0, %v370
        %v372 = vrot.slane %v367, %v371
        %374 = vmatprep.subr.mxu0 0.0
        %375 = vmatpush1.msra.mxu0 %v366
        %376 = vmatprep.subr.mxu0 0.0
        %377 = vmatpush1.msra.mxu0 %v365
        %378 = vmatprep.subr.mxu0 0.0
        %379 = vmatpush1.msra.mxu0 %v364
        %380 = vmatprep.subr.mxu0 0.0
        %381 = vmatpush1.msra.mxu0 %v363
        %382 = vmatprep.subr.mxu0 0.0
        %383 = vmatpush1.msra.mxu0 %v362
        %384 = vmatprep.subr.mxu0 0.0
        %385 = vmatpush1.msra.mxu0 %v361
        %386 = vmatprep.subr.mxu0 0.0
        %387 = vmatpush1.msra.mxu0 %v360
        %388 = vmatprep.subr.mxu0 0.0
        %389 = vmatpush1.msra.mxu0 %v359
        %390 = vmatprep.subr.mxu0 0.0
        %391 = vmatpush1.msra.mxu0 %v358
        %392 = vmatprep.subr.mxu0 0.0
        %393 = vmatpush1.msra.mxu0 %v357
        %394 = vmatprep.subr.mxu0 0.0
        %395 = vmatpush1.msra.mxu0 %v356
        %396 = vmatprep.subr.mxu0 0.0
        %397 = vmatpush1.msra.mxu0 %v355
        %398 = vmatprep.subr.mxu0 0.0
        %399 = vmatpush1.msra.mxu0 %v354
        %400 = vmatprep.subr.mxu0 0.0
        %401 = vmatpush1.msra.mxu0 %v353
        %402 = vmatprep.subr.mxu0 0.0
        %403 = vmatpush1.msra.mxu0 %v352
        %404 = vmatprep.subr.mxu0 0.0
        %405 = vmatpush1.msra.mxu0 %v351
        %406 = vmatprep.subr.mxu0 0.0
        %407 = vmatpush2.msra.mxu0 0.0
        %408 = vmatprep.subr.mxu0 0.0
        %409 = vmatpush2.msra.mxu0 0.0
        %410 = vmatprep.subr.mxu0 0.0
        %411 = vmatpush2.msra.mxu0 0.0
        %412 = vmatprep.subr.mxu0 0.0
        %413 = vmatpush2.msra.mxu0 0.0
        %414 = vmatprep.subr.mxu0 0.0
        %415 = vmatpush2.msra.mxu0 0.0
        %416 = vmatprep.subr.mxu0 0.0
        %417 = vmatpush2.msra.mxu0 0.0
        %418 = vmatprep.subr.mxu0 0.0
        %419 = vmatpush2.msra.mxu0 0.0
        %420 = vmatprep.subr.mxu0 0.0
        %421 = vmatpush2.msra.mxu0 0.0
        %422 = vmatprep.subr.mxu0 0.0
        %423 = vmatpush2.msra.mxu0 0.0
        %424 = vmatprep.subr.mxu0 0.0
        %425 = vmatpush2.msra.mxu0 0.0
        %426 = vmatprep.subr.mxu0 0.0
        %427 = vmatpush2.msra.mxu0 0.0
        %428 = vmatprep.subr.mxu0 0.0
        %429 = vmatpush2.msra.mxu0 0.0
        %430 = vmatprep.subr.mxu0 0.0
        %431 = vmatpush2.msra.mxu0 0.0
        %432 = vmatprep.subr.mxu0 0.0
        %433 = vmatpush2.msra.mxu0 0.0
        %434 = vmatprep.subr.mxu0 0.0
        %435 = vmatpush2.msra.mxu0 0.0
        %436 = vmatprep.subr.mxu0 0.0
        %437 = vmatpush2.msra.mxu0 0.0
        %438 = vmatprep.mubr.f32.mxu0 0.0
        %439 = vmatmul.mubr.f32.gmra.mxu0 %v349
        %v440 = vpop.f32.mrf.mxu0
        %v441 = vadd.f32 %v372, %v440
        %v442 = vpop.f32.mrf.mxu0
        %443 = vmatprep.mubr.f32.mxu0 0.0
        %444 = vmatmul.mubr.f32.gmra.mxu0 %v350
        %v445 = vpop.f32.mrf.mxu0
        %v446 = vadd.f32 %v372, %v445
        %v447 = vpop.f32.mrf.mxu0
        %448 = vdwg.mxu0
        %v449 = vld [vmem:[#allocation2] sm:$0xff]
        %v450 = vld [vmem:[#allocation2 + $0x8] sm:$0xff]
        %v451 = vld [vmem:[%s303] sm:$0xff]
        %v452 = vld [vmem:[%s303 + $0x8] sm:$0xff]
        %vm453 = vcmask 130048
        %v455 = vsel %vm453, %v451, 0
        %v458 = vsel %vm453, %v452, 0
        %460 = vmatprep.subr.mxu0 0.0
        %461 = vmatpush1.msra.mxu0 0.0
        %462 = vmatprep.subr.mxu0 0.0
        %463 = vmatpush1.msra.mxu0 0.0
        %464 = vmatprep.subr.mxu0 0.0
        %465 = vmatpush1.msra.mxu0 0.0
        %466 = vmatprep.subr.mxu0 0.0
        %467 = vmatpush1.msra.mxu0 0.0
        %468 = vmatprep.subr.mxu0 0.0
        %469 = vmatpush1.msra.mxu0 0.0
        %470 = vmatprep.subr.mxu0 0.0
        %471 = vmatpush1.msra.mxu0 0.0
        %472 = vmatprep.subr.mxu0 0.0
        %473 = vmatpush1.msra.mxu0 0.0
        %474 = vmatprep.subr.mxu0 0.0
        %475 = vmatpush1.msra.mxu0 0.0
        %476 = vmatprep.subr.mxu0 0.0
        %477 = vmatpush1.msra.mxu0 0.0
        %478 = vmatprep.subr.mxu0 0.0
        %479 = vmatpush1.msra.mxu0 0.0
        %480 = vmatprep.subr.mxu0 0.0
        %481 = vmatpush1.msra.mxu0 0.0
        %482 = vmatprep.subr.mxu0 0.0
        %483 = vmatpush1.msra.mxu0 0.0
        %484 = vmatprep.subr.mxu0 0.0
        %485 = vmatpush1.msra.mxu0 0.0
        %486 = vmatprep.subr.mxu0 0.0
        %487 = vmatpush1.msra.mxu0 0.0
        %488 = vmatprep.subr.mxu0 0.0
        %489 = vmatpush1.msra.mxu0 %v446
        %490 = vmatprep.subr.mxu0 0.0
        %491 = vmatpush1.msra.mxu0 %v441
        %492 = vmatprep.subr.mxu0 0.0
        %493 = vmatpush2.msra.mxu0 0.0
        %494 = vmatprep.subr.mxu0 0.0
        %495 = vmatpush2.msra.mxu0 0.0
        %496 = vmatprep.subr.mxu0 0.0
        %497 = vmatpush2.msra.mxu0 0.0
        %498 = vmatprep.subr.mxu0 0.0
        %499 = vmatpush2.msra.mxu0 0.0
        %500 = vmatprep.subr.mxu0 0.0
        %501 = vmatpush2.msra.mxu0 0.0
        %502 = vmatprep.subr.mxu0 0.0
        %503 = vmatpush2.msra.mxu0 0.0
        %504 = vmatprep.subr.mxu0 0.0
        %505 = vmatpush2.msra.mxu0 0.0
        %506 = vmatprep.subr.mxu0 0.0
        %507 = vmatpush2.msra.mxu0 0.0
        %508 = vmatprep.subr.mxu0 0.0
        %509 = vmatpush2.msra.mxu0 0.0
        %510 = vmatprep.subr.mxu0 0.0
        %511 = vmatpush2.msra.mxu0 0.0
        %512 = vmatprep.subr.mxu0 0.0
        %513 = vmatpush2.msra.mxu0 0.0
        %514 = vmatprep.subr.mxu0 0.0
        %515 = vmatpush2.msra.mxu0 0.0
        %516 = vmatprep.subr.mxu0 0.0
        %517 = vmatpush2.msra.mxu0 0.0
        %518 = vmatprep.subr.mxu0 0.0
        %519 = vmatpush2.msra.mxu0 0.0
        %520 = vmatprep.subr.mxu0 0.0
        %521 = vmatpush2.msra.mxu0 0.0
        %522 = vmatprep.subr.mxu0 0.0
        %523 = vmatpush2.msra.mxu0 0.0
        %524 = vmatprep.mubr.f32.mxu0 0.0
        %525 = vmatmul.mubr.f32.gmra.mxu0 %v455
        %v526 = vpop.f32.mrf.mxu0
        %v527 = vadd.f32 0.0, %v526
        %v528 = vpop.f32.mrf.mxu0
        %529 = vmatprep.mubr.f32.mxu0 0.0
        %530 = vmatmul.mubr.f32.gmra.mxu0 %v458
        %v531 = vpop.f32.mrf.mxu0
        %v532 = vadd.f32 0.0, %v531
        %v533 = vpop.f32.mrf.mxu0
        %534 = vdwg.mxu0
        %v535 = vadd.f32 %v449, %v527
        %v536 = vadd.f32 %v450, %v532
        %537 = vst [vmem:[#allocation2] sm:$0xff] %v535
        %538 = vst [vmem:[#allocation2 + $0x8] sm:$0xff] %v536
        // Predicated region
        $region53: #{tpu_custom_call.1} parent=35 // pred_check
          %p539 = pneg %p343
        $region54: #{tpu_custom_call.1} parent=35 // pred_check_branch
          %541 = sbr.rel (%p539) target = $region56
        $region55: #{tpu_custom_call.1} parent=35 // pred_region
          %v542 = vld [vmem:[#allocation2] sm:$0xff]
          %v543 = vld [vmem:[#allocation2 + $0x8] sm:$0xff]
          %544 = vst [vmem:[%s332] sm:$0xff] %v542
          %545 = vst [vmem:[%s332 + $0x8] sm:$0xff] %v543
          %v546 = vadd.f32 %v542, %v543
          %v547 = vrot.slane %v546, 4
          %v548 = vadd.f32 %v546, %v547
          %v549 = vrot.slane %v548, 2
          %v550 = vadd.f32 %v548, %v549
          %v551 = vrot.slane %v550, 1
          %v552 = vadd.f32 %v550, %v551
          %v553 = vmul.f32 %v542, %v542
          %v554 = vmul.f32 %v543, %v543
          %v555 = vadd.f32 %v553, %v554
          %v556 = vrot.slane %v555, 4
          %v557 = vadd.f32 %v555, %v556
          %v558 = vrot.slane %v557, 2
          %v559 = vadd.f32 %v557, %v558
          %v560 = vrot.slane %v559, 1
          %v561 = vadd.f32 %v559, %v560
          %vm562 = vcmask 1040384
          %v563 = vsel %vm562, %v552, %v561
          %564 = vst [vmem:[%s339] sm:$0x3] %v563
        $region56: #{tpu_custom_call.1} parent=35 // pred_fallthru
          _
        %s565 = sand.u32 %s156, 1
        %s566 = scalar_lea.sflag [#allocation5], %s565
        %s567 = sand.u32 %s156, 1
        %s568 = smul.addr %s567, 16
        %s569 = scalar_lea.vmem [#allocation9], %s568
        %s570 = sand.u32 %s184, 1
        %s571 = scalar_lea.sflag [#allocation11], %s570
        %s572 = sand.u32 %s184, 1
        %s573 = smul.addr %s572, 2
        %s574 = scalar_lea.vmem [#allocation10], %s573
        // Predicated region
        $region57: #{tpu_custom_call.1} parent=35 // pred_check
          %p575 = pneg %p166
        $region58: #{tpu_custom_call.1} parent=35 // pred_check_branch
          %577 = sbr.rel (%p575) target = $region60
        $region59: #{tpu_custom_call.1} parent=35 // pred_region
          %s578 = smul.u32 2, %s33
          %s580 = ssub.s32 256, 256
          %581 = vsyncadd %s566, %s580
          %s582 = smul.addr %s32, 2
          %s583 = sadd.s32 %s578, %s582
          %s584 = smul.addr %s583, 128
          %s585 = scalar_lea.hbm %s4, %s584
          %s586 = sshll.u32 %s569, 4
          %s587 = int_to_ptr.vmem [resolvable:$true] %s586
          %592 = dma.vmem_to_hbm [thread:$0]  %s587, 256, %s585, %s566, 128, 128, 8
        $region60: #{tpu_custom_call.1} parent=35 // pred_fallthru
          _
        // Predicated region
        $region61: #{tpu_custom_call.1} parent=35 // pred_check
          %p593 = pneg %p194
        $region62: #{tpu_custom_call.1} parent=35 // pred_check_branch
          %595 = sbr.rel (%p593) target = $region64
        $region63: #{tpu_custom_call.1} parent=35 // pred_region
          %s597 = ssub.s32 32, 32
          %598 = vsyncadd %s571, %s597
          %s599 = sadd.s32 %s33, %s32
          %s600 = smul.addr %s599, 32
          %s601 = scalar_lea.hbm %s5, %s600
          %s603 = sshll.u32 %s574, 4
          %s604 = int_to_ptr.vmem [resolvable:$true] %s603
          %606 = dma.vmem_to_hbm [thread:$0]  %s604, 32, %s601, %s571
        $region64: #{tpu_custom_call.1} parent=35 // pred_fallthru
          _
      $region36: #{tpu_custom_call.1} parent=5 // pred_fallthru
        _
      %p607 = scmp.le.s32.totalorder 2, %s22
      // Predicated region
      $region65: #{tpu_custom_call.1} parent=5 // pred_check
        %p608 = pneg %p607
      $region66: #{tpu_custom_call.1} parent=5 // pred_check_branch
        %610 = sbr.rel (%p608) target = $region68
      $region67: #{tpu_custom_call.1} parent=5 // pred_region
        %s611 = ssub.s32 %s22, 2
        // Predicated region
        $region69: #{tpu_custom_call.1} parent=67 // pred_check
          %p612 = pneg %p172
        $region70: #{tpu_custom_call.1} parent=67 // pred_check_branch
          %614 = sbr.rel (%p612) target = $region72
        $region71: #{tpu_custom_call.1} parent=67 // pred_region
          %s615 = sand.u32 %s157, 1
          %s616 = scalar_lea.sflag [#allocation5], %s615
          %s617 = sand.u32 %s157, 1
          %s618 = smul.addr %s617, 16
          %s619 = scalar_lea.vmem [#allocation9], %s618
          %620 = dma.done %s616, 256
        $region72: #{tpu_custom_call.1} parent=67 // pred_fallthru
          _
        // Predicated region
        $region73: #{tpu_custom_call.1} parent=67 // pred_check
          %p621 = pneg %p200
        $region74: #{tpu_custom_call.1} parent=67 // pred_check_branch
          %623 = sbr.rel (%p621) target = $region76
        $region75: #{tpu_custom_call.1} parent=67 // pred_region
          %s624 = sand.u32 %s185, 1
          %s625 = scalar_lea.sflag [#allocation11], %s624
          %s626 = sand.u32 %s185, 1
          %s627 = smul.addr %s626, 2
          %s628 = scalar_lea.vmem [#allocation10], %s627
          %629 = dma.done %s625, 32
        $region76: #{tpu_custom_call.1} parent=67 // pred_fallthru
          _
      $region68: #{tpu_custom_call.1} parent=5 // pred_fallthru
        _
    $region6: #{tpu_custom_call.1} parent=1 // loop_footer
      %s26 = sadd.s32 1, %s22
    $region7: #{tpu_custom_call.1} parent=1 // loop_footer_branch
      %21 = sbr.rel target = $region3
    $region8: #{tpu_custom_call.1} parent=1 // loop_exit
      _
    %630 = vsyncpa [#allocation4], 1
    %s631 = scalar_lea.sflag [#allocation4], 1
    %632 = vsyncpa %s631, 1
    %633 = vsyncpa [#allocation7], 1
    %634 = vsyncpa [#allocation5], 1
    %s635 = scalar_lea.sflag [#allocation5], 1
    %636 = vsyncpa %s635, 1
    %637 = vsyncpa [#allocation11], 1
    %s638 = scalar_lea.sflag [#allocation11], 1
    %639 = vsyncpa %s638, 1

</llo_original>
